<compile_context>
chip_gen: v7x
topology: tpu7x:2x2x1
jax: 0.10.0
libtpu: 0.0.40
codegen_flags: <defaults>
</compile_context>

<pallas_src>
import functools
import math

import jax
import jax.numpy as jnp
from jax.experimental import pallas as pl
from jax.experimental.pallas import tpu as pltpu


def _round_up(x, m):
    return ((x + m - 1) // m) * m


def _yolov7_loss_kernel(pred_ref, tgt_ref, out_ref, *,
                        D, n_boxes, num_classes,
                        lambda_coord, lambda_noobj,
                        valid_rows_last, last_tile_ragged, lane_periodic):
    # Load tile in native dtype, do all math in f32.
    x = pred_ref[...].astype(jnp.float32)        # (tile_rows, 128)
    z = tgt_ref[...].astype(jnp.float32)
    tile_rows, width = x.shape

    n = float(n_boxes)
    c = float(max(num_classes, 1))
    w_box_sq = lambda_coord / (4.0 * n)          # box MSE (mean over 4n elems)
    w_obj_msp = (1.0 + lambda_noobj) / n         # obj BCE + no-obj BCE fused
    w_obj_xz = 1.0 / n
    w_cls = 1.0 / (n * c)                        # class BCE (mean over n*c)

    lane = jax.lax.broadcasted_iota(jnp.int32, (1, width), 1)
    if lane_periodic:
        feat = lane % D                          # static per-lane pattern
    else:
        # Tile start is a multiple of D by construction (tile_rows*128 % D == 0),
        # so the tile-local flat index gives the feature index in every tile.
        row = jax.lax.broadcasted_iota(jnp.int32, (tile_rows, width), 0)
        feat = (row * width + lane) % D

    is_box = feat < 4
    is_obj = feat == 4
    is_cls = feat >= 5
    w_sq = jnp.where(is_box, w_box_sq, 0.0).astype(jnp.float32)
    w_msp = jnp.where(is_obj, w_obj_msp,
                      jnp.where(is_cls, w_cls, 0.0)).astype(jnp.float32)
    w_xz = jnp.where(is_obj, w_obj_xz,
                     jnp.where(is_cls, w_cls, 0.0)).astype(jnp.float32)

    def tile_partial(row_mask):
        d = x - z
        # One transcendental pass: BCE(x, z) = max(x,0) - x*z + log1p(exp(-|x|))
        msp = jnp.maximum(x, 0.0) + jnp.log1p(jnp.exp(-jnp.abs(x)))
        t_sq, t_msp, t_xz = d * d, msp, x * z
        if row_mask is not None:                 # only traced for the last tile
            t_sq = jnp.where(row_mask, t_sq, 0.0)
            t_msp = jnp.where(row_mask, t_msp, 0.0)
            t_xz = jnp.where(row_mask, t_xz, 0.0)
        if lane_periodic:
            # Un-weighted sublane reduction first; per-lane weights applied once
            # on (1, 128) rows instead of 3 mul + 2 add per element.
            s_sq = jnp.sum(t_sq, axis=0, keepdims=True)
            s_msp = jnp.sum(t_msp, axis=0, keepdims=True)
            s_xz = jnp.sum(t_xz, axis=0, keepdims=True)
            return jnp.sum(w_sq * s_sq + w_msp * s_msp - w_xz * s_xz)
        return jnp.sum(w_sq * t_sq + w_msp * t_msp - w_xz * t_xz)

    def store(partial):
        # Lane-dense (unmasked) store of the per-tile partial; only [0,0] is read.
        out_ref[...] = jnp.broadcast_to(partial, out_ref.shape)

    if last_tile_ragged:
        is_last = pl.program_id(0) == pl.num_programs(0) - 1

        @pl.when(is_last)
        def _():
            # Tile-local row mask: OOB rows of the final block hold garbage.
            row = jax.lax.broadcasted_iota(jnp.int32, (tile_rows, 1), 0)
            store(tile_partial(row < valid_rows_last))

        @pl.when(jnp.logical_not(is_last))
        def _():
            store(tile_partial(None))
    else:
        store(tile_partial(None))


def yolov7_loss(pred, target, num_classes,
                lambda_coord=5.0, lambda_noobj=0.5, tile_rows_max=2048):
    """pred, target: [B, num_anchors, 5 + num_classes] arrays (any float dtype)."""
    B, A, D = pred.shape
    assert D == 5 + num_classes
    assert target.shape == pred.shape
    n_boxes = B * A
    total = n_boxes * D
    width = 128

    # ---- lane-dense [rows, 128] view of the flat element stream ------------
    padded_total = _round_up(total, width)
    pad = padded_total - total
    rows = padded_total // width
    lane_periodic = (width % D == 0)

    # ---- tiling -------------------------------------------------------------
    # The feature pattern (flat_idx % D) repeats every `row_period` rows; tiles
    # must start on a period boundary so the in-kernel iota is tile-invariant,
    # and interior tiles need sublane-divisible (x8) row counts.
    row_period = D // math.gcd(D, width)
    unit = (row_period * 8) // math.gcd(row_period, 8)   # lcm(row_period, 8)
    if rows <= max(unit, 64):
        tile_rows, grid = rows, 1                         # single full-extent tile
    else:
        # Cap so the grid has >=2 steps (v7x 2-TC sharding), up to ~1 MiB tiles.
        cap = min(tile_rows_max, _round_up(pl.cdiv(rows, 2), unit))
        tile_rows = max(unit, (cap // unit) * unit)
        grid = pl.cdiv(rows, tile_rows)
    valid_rows_last = rows - (grid - 1) * tile_rows
    last_tile_ragged = valid_rows_last < tile_rows

    # Statically-known contribution of the (<128) zero-padded tail elements:
    # BCE(0, 0) = ln 2 on each obj/cls lane. Subtracted after the kernel sum.
    pad_correction = 0.0
    if pad:
        ln2 = math.log(2.0)
        for p in range(total, padded_total):
            f = p % D
            if f == 4:
                pad_correction += (1.0 + lambda_noobj) / n_boxes * ln2
            elif f >= 5:
                pad_correction += 1.0 / (n_boxes * max(num_classes, 1)) * ln2

    def pack(a):
        flat = a.reshape(-1)                    # native dtype stays in HBM
        if pad:
            # TODO(synk): this pad re-copies the input; only hit when B*A*D is
            # not a multiple of 128.
            flat = jnp.pad(flat, (0, pad))
        return flat.reshape(rows, width)        # free bitcast when pad == 0

    kernel = functools.partial(
        _yolov7_loss_kernel,
        D=D, n_boxes=n_boxes, num_classes=num_classes,
        lambda_coord=float(lambda_coord), lambda_noobj=float(lambda_noobj),
        valid_rows_last=valid_rows_last, last_tile_ragged=last_tile_ragged,
        lane_periodic=lane_periodic)

    out = pl.pallas_call(
        kernel,
        out_shape=jax.ShapeDtypeStruct((grid, 8, width), jnp.float32),
        grid=(grid,),
        in_specs=[pl.BlockSpec((tile_rows, width), lambda i: (i, 0)),
                  pl.BlockSpec((tile_rows, width), lambda i: (i, 0))],
        out_specs=pl.BlockSpec((1, 8, width), lambda i: (i, 0, 0)),
        compiler_params=pltpu.CompilerParams(
            dimension_semantics=("parallel",)),
    )(pack(pred), pack(target))

    # Tiny host-side reduction of exact per-tile partials (scaling is already
    # folded into the per-lane weights).
    loss = jnp.sum(out[:, 0, 0])
    if pad_correction:
        loss = loss - jnp.float32(pad_correction)
    return loss


# ---------------------------------------------------------------------------
# Pure-JAX reference (mirrors the PyTorch module).
# ---------------------------------------------------------------------------
def _bce_with_logits(x, z):
    return jnp.maximum(x, 0.0) - x * z + jnp.log1p(jnp.exp(-jnp.abs(x)))


def _yolov7_loss_ref(pred, target, num_classes,
                     lambda_coord=5.0, lambda_noobj=0.5):
    pred = pred.astype(jnp.float32)
    target = target.astype(jnp.float32)
    pb, po, pc = pred[..., :4], pred[..., 4], pred[..., 5:]
    tb, to, tc = target[..., :4], target[..., 4], target[..., 5:]
    box = lambda_coord * jnp.mean((pb - tb) ** 2)
    obj = jnp.mean(_bce_with_logits(po, to))
    cls = jnp.mean(_bce_with_logits(pc, tc))
    noobj = lambda_noobj * jnp.mean(_bce_with_logits(po, jnp.zeros_like(po)))
    return box + obj + cls + noobj


if __name__ == "__main__":
    def check(B, A, num_classes, key):
        D = 5 + num_classes
        kp, kt = jax.random.split(key)
        pred = jax.random.normal(kp, (B, A, D), dtype=jnp.float32)
        target = jax.random.uniform(kt, (B, A, D), dtype=jnp.float32)
        loss = jax.block_until_ready(yolov7_loss(pred, target, num_classes))
        ref = _yolov7_loss_ref(pred, target, num_classes)
        assert jnp.allclose(loss, ref, rtol=1e-5, atol=1e-5), \
            (B, A, num_classes, loss, ref)

    key = jax.random.PRNGKey(0)
    k1, k2, k3 = jax.random.split(key, 3)
    # Demo config: D = 16 divides 128 -> lane-periodic, single-tile path.
    check(2, 8, 11, k1)
    # Real YOLOv7 head width: D = 85 (doesn't divide 128) + padded-tail path.
    check(1, 1, 80, k2)
    # Multi-tile grid with a ragged last block (mask only on the last step).
    check(2, 260, 11, k3)
    print("KERNEL_OK")
</pallas_src>

<mosaic_0001>
module attributes {stable_mosaic.version = 11 : i64} {
  func.func @_yolov7_loss_kernel(%arg0: i32, %arg1: memref<2x128xf32, #tpu.memory_space<vmem>>, %arg2: memref<2x128xf32, #tpu.memory_space<vmem>>, %arg3: memref<1x8x128xf32, #tpu.memory_space<vmem>>) attributes {dimension_semantics = [#tpu.dimension_semantics<parallel>], iteration_bounds = array<i64: 1>, scalar_prefetch = 0 : i64, scratch_operands = 0 : i64, tpu.core_type = #tpu.core_type<tc>, window_params = [{transform_indices = @transform_0, window_bounds = array<i64: 2, 128>}, {transform_indices = @transform_1, window_bounds = array<i64: 2, 128>}, {transform_indices = @transform_2, window_bounds = array<i64: 1, 8, 128>}]} {
    %c0 = arith.constant 0 : index
    %c0_0 = arith.constant 0 : index
    %0 = vector.load %arg1[%c0, %c0_0] : memref<2x128xf32, #tpu.memory_space<vmem>>, vector<2x128xf32>
    %c0_1 = arith.constant 0 : index
    %c0_2 = arith.constant 0 : index
    %1 = vector.load %arg2[%c0_1, %c0_2] : memref<2x128xf32, #tpu.memory_space<vmem>>, vector<2x128xf32>
    %2 = tpu.iota {dimensions = array<i32: 1>} : vector<1x128xi32>
    %c16_i32 = arith.constant 16 : i32
    %c0_i32 = arith.constant 0 : i32
    %3 = arith.cmpi eq, %c16_i32, %c0_i32 : i32
    %c1_i32 = arith.constant 1 : i32
    %4 = arith.select %3, %c1_i32, %c16_i32 : i32
    %5 = vector.broadcast %4 : i32 to vector<1x128xi32>
    %6 = arith.remsi %2, %5 : vector<1x128xi32>
    %c0_i32_3 = arith.constant 0 : i32
    %7 = vector.broadcast %c0_i32_3 : i32 to vector<1x128xi32>
    %8 = arith.cmpi ne, %6, %7 : vector<1x128xi32>
    %c0_i32_4 = arith.constant 0 : i32
    %9 = vector.broadcast %c0_i32_4 : i32 to vector<1x128xi32>
    %10 = arith.cmpi slt, %6, %9 : vector<1x128xi32>
    %c0_i32_5 = arith.constant 0 : i32
    %11 = arith.cmpi slt, %4, %c0_i32_5 : i32
    %12 = vector.broadcast %11 : i1 to vector<1x128xi1>
    %13 = vector.broadcast %12 : vector<1x128xi1> to vector<1x128xi1>
    %14 = arith.xori %10, %13 : vector<1x128xi1>
    %15 = arith.andi %14, %8 : vector<1x128xi1>
    %16 = vector.broadcast %4 : i32 to vector<1x128xi32>
    %17 = arith.addi %6, %16 : vector<1x128xi32>
    %18 = arith.select %15, %17, %6 : vector<1x128xi1>, vector<1x128xi32>
    %c4_i32 = arith.constant 4 : i32
    %19 = vector.broadcast %c4_i32 : i32 to vector<1x128xi32>
    %20 = arith.cmpi slt, %18, %19 : vector<1x128xi32>
    %c4_i32_6 = arith.constant 4 : i32
    %21 = vector.broadcast %c4_i32_6 : i32 to vector<1x128xi32>
    %22 = arith.cmpi eq, %18, %21 : vector<1x128xi32>
    %c5_i32 = arith.constant 5 : i32
    %23 = vector.broadcast %c5_i32 : i32 to vector<1x128xi32>
    %24 = arith.cmpi sge, %18, %23 : vector<1x128xi32>
    %cst = arith.constant 7.812500e-02 : f32
    %cst_7 = arith.constant 0.000000e+00 : f32
    %25 = vector.broadcast %cst : f32 to vector<1x128xf32>
    %26 = vector.broadcast %cst_7 : f32 to vector<1x128xf32>
    %27 = arith.select %20, %25, %26 : vector<1x128xi1>, vector<1x128xf32>
    %cst_8 = arith.constant 0.00568181835 : f32
    %cst_9 = arith.constant 0.000000e+00 : f32
    %28 = vector.broadcast %cst_8 : f32 to vector<1x128xf32>
    %29 = vector.broadcast %cst_9 : f32 to vector<1x128xf32>
    %30 = arith.select %24, %28, %29 : vector<1x128xi1>, vector<1x128xf32>
    %cst_10 = arith.constant 9.375000e-02 : f32
    %31 = vector.broadcast %cst_10 : f32 to vector<1x128xf32>
    %32 = arith.select %22, %31, %30 : vector<1x128xi1>, vector<1x128xf32>
    %cst_11 = arith.constant 0.00568181835 : f32
    %cst_12 = arith.constant 0.000000e+00 : f32
    %33 = vector.broadcast %cst_11 : f32 to vector<1x128xf32>
    %34 = vector.broadcast %cst_12 : f32 to vector<1x128xf32>
    %35 = arith.select %24, %33, %34 : vector<1x128xi1>, vector<1x128xf32>
    %cst_13 = arith.constant 6.250000e-02 : f32
    %36 = vector.broadcast %cst_13 : f32 to vector<1x128xf32>
    %37 = arith.select %22, %36, %35 : vector<1x128xi1>, vector<1x128xf32>
    %38 = arith.subf %0, %1 : vector<2x128xf32>
    %cst_14 = arith.constant 0.000000e+00 : f32
    %39 = vector.broadcast %cst_14 : f32 to vector<2x128xf32>
    %40 = arith.maximumf %0, %39 : vector<2x128xf32>
    %41 = math.absf %0 : vector<2x128xf32>
    %cst_15 = arith.constant 0.000000e+00 : f32
    %42 = vector.broadcast %cst_15 : f32 to vector<2x128xf32>
    %43 = arith.subf %42, %41 : vector<2x128xf32>
    %44 = math.exp %43 : vector<2x128xf32>
    %45 = math.log1p %44 : vector<2x128xf32>
    %46 = arith.addf %40, %45 : vector<2x128xf32>
    %47 = arith.mulf %38, %38 : vector<2x128xf32>
    %48 = arith.mulf %0, %1 : vector<2x128xf32>
    %cst_16 = arith.constant dense<0.000000e+00> : vector<128xf32>
    %49 = vector.multi_reduction <add>, %47, %cst_16 [0] : vector<2x128xf32> to vector<128xf32>
    %50 = vector.shape_cast %49 : vector<128xf32> to vector<1x128xf32>
    %cst_17 = arith.constant dense<0.000000e+00> : vector<128xf32>
    %51 = vector.multi_reduction <add>, %46, %cst_17 [0] : vector<2x128xf32> to vector<128xf32>
    %52 = vector.shape_cast %51 : vector<128xf32> to vector<1x128xf32>
    %cst_18 = arith.constant dense<0.000000e+00> : vector<128xf32>
    %53 = vector.multi_reduction <add>, %48, %cst_18 [0] : vector<2x128xf32> to vector<128xf32>
    %54 = vector.shape_cast %53 : vector<128xf32> to vector<1x128xf32>
    %55 = arith.mulf %27, %50 : vector<1x128xf32>
    %56 = arith.mulf %32, %52 : vector<1x128xf32>
    %57 = arith.addf %55, %56 : vector<1x128xf32>
    %58 = arith.mulf %37, %54 : vector<1x128xf32>
    %59 = arith.subf %57, %58 : vector<1x128xf32>
    %60 = vector.shape_cast %59 : vector<1x128xf32> to vector<1x1x128xf32>
    %cst_19 = arith.constant dense<0.000000e+00> : vector<1xf32>
    %61 = vector.multi_reduction <add>, %60, %cst_19 [1, 2] : vector<1x1x128xf32> to vector<1xf32>
    %62 = vector.shape_cast %61 : vector<1xf32> to vector<1x1x1xf32>
    %63 = vector.extract %62[0, 0, 0] : f32 from vector<1x1x1xf32>
    %64 = vector.broadcast %63 : f32 to vector<1x8x128xf32>
    %c0_20 = arith.constant 0 : index
    %c0_21 = arith.constant 0 : index
    %c0_22 = arith.constant 0 : index
    %65 = vector.load %arg3[%c0_20, %c0_21, %c0_22] : memref<1x8x128xf32, #tpu.memory_space<vmem>>, vector<1x8x128xf32>
    tpu.vector_store %arg3[%c0_20, %c0_21, %c0_22], %64 {strides = array<i32>} : memref<1x8x128xf32, #tpu.memory_space<vmem>>, vector<1x8x128xf32>,
    return
  }
  func.func @transform_0(%arg0: i32) -> (i32, i32) {
    %c0_i32 = arith.constant 0 : i32
    %c0_i32_0 = arith.constant 0 : i32
    return %arg0, %c0_i32 : i32, i32
  }
  func.func @transform_1(%arg0: i32) -> (i32, i32) {
    %c0_i32 = arith.constant 0 : i32
    %c0_i32_0 = arith.constant 0 : i32
    return %arg0, %c0_i32 : i32, i32
  }
  func.func @transform_2(%arg0: i32) -> (i32, i32, i32) {
    %c0_i32 = arith.constant 0 : i32
    %c0_i32_0 = arith.constant 0 : i32
    %c0_i32_1 = arith.constant 0 : i32
    return %arg0, %c0_i32, %c0_i32_0 : i32, i32, i32
  }
}

</mosaic_0001>

<llo_original>
// kernel: tpu_custom_call.1
$region0: #{tpu_custom_call.1}
  #allocation0 [shape = 'u32[]', space=smem, size = 0x4, offset = 0x4, fixed_abs, tag = 'smem constant byte address 0x4 - core index']
  #allocation1 [shape = 'u32[144,128]{1,0:T(1,128)}', space=vmem, size = 0x12000, scoped, tag = 'internal scratch']
  %s0 = inlined_call_operand.hbm [shape: f32[2,128], index: 0, kind: input, shape index: {}]
  %s1 = inlined_call_operand.vmem [shape: f32[2,128], index: 1, kind: input, shape index: {}]
  %s2 = inlined_call_operand.hbm [shape: f32[1,8,128], index: 2, kind: output, shape index: {}]
  %s3 = sld [smem:[#allocation0]]
  $region22: #{tpu_custom_call.1} parent=0
    _
  %s5 = ssub.s32 1, %s3
  %s6 = scalar_select 0, %s5, %s3
  $region1: #{tpu_custom_call.1} parent=0
    #allocation2 [shape = 'u8[1024]{0}', space=vmem, size = 0x400, scoped, tag = 'input window, operand 0, single buffered']
    #allocation3 [shape = 's32[1]{0}', space=sflag, size = 0x4, scoped, tag = 'scoped memory for tpu_custom_call.1']
    #allocation4 [shape = 's32[1]{0}', space=sflag, size = 0x4, scoped, tag = 'scoped memory for tpu_custom_call.1']
    #allocation5 [shape = 'u8[4096]{0}', space=vmem, size = 0x1000, scoped, tag = 'output window, operand 0, single buffered']
    %7 = vsyncpa [#allocation3], 0
    %8 = vsyncpa [#allocation4], 0
    // Predicated region
    $region2: #{tpu_custom_call.1} parent=1 // pred_check
      _
    $region3: #{tpu_custom_call.1} parent=1 // pred_check_branch
      %10 = sbr.rel (0) target = $region5
    $region4: #{tpu_custom_call.1} parent=1 // pred_region
      %s12 = ssub.s32 32, 32
      %13 = vsyncadd [#allocation3], %s12
      %s15 = sshll.u32 [#allocation2], 4
      %s16 = int_to_ptr.vmem [resolvable:$true] %s15
      %18 = dma.hbm_to_vmem [thread:$0]  %s0, 32, %s16, [#allocation3]
    $region5: #{tpu_custom_call.1} parent=1 // pred_fallthru
      _
    // Predicated region
    $region6: #{tpu_custom_call.1} parent=1 // pred_check
      _
    $region7: #{tpu_custom_call.1} parent=1 // pred_check_branch
      %20 = sbr.rel (0) target = $region9
    $region8: #{tpu_custom_call.1} parent=1 // pred_region
      _
    $region9: #{tpu_custom_call.1} parent=1 // pred_fallthru
      _
    // Predicated region
    $region10: #{tpu_custom_call.1} parent=1 // pred_check
      _
    $region11: #{tpu_custom_call.1} parent=1 // pred_check_branch
      %22 = sbr.rel (0) target = $region13
    $region12: #{tpu_custom_call.1} parent=1 // pred_region
      %23 = dma.done [#allocation3], 32
    $region13: #{tpu_custom_call.1} parent=1 // pred_fallthru
      _
    %v24 = vld [vmem:[#allocation2] sm:$0x3]
    %v25 = vld [vmem:[%s1] sm:$0x3]
    %v26 = vlaneseq
    %v27 = vand.u32 %v26, 127
    %vm28 = vcmp.lt.s32.totalorder %v27, 0
    %v29 = vsub.s32 0, %v27
    %v30 = vsel %vm28, %v29, %v27
    %v31 = vshrl.u32 %v30, 4
    %v32 = vand.u32 %v30, 15
    %v33 = vsub.s32 0, %v32
    %v34 = vsel %vm28, %v33, %v32
    %vm35 = vcmp.ne.s32.totalorder %v34, 0
    %vm36 = vcmp.lt.s32.totalorder %v34, 0
    %vm37 = vmand %vm36, %vm35
    %v38 = vadd.s32 %v34, 16
    %v39 = vsel %vm37, %v38, %v34
    %vm40 = vcmp.lt.s32.totalorder %v39, 4
    %vm41 = vcmp.eq.s32.totalorder %v39, 4
    %vm42 = vcmp.ge.s32.totalorder %v39, 5
    %v43 = vsel %vm40, 0.078125, 0.0
    %v44 = vsel %vm42, 0.0056818184, 0.0
    %v45 = vsel %vm41, 0.09375, %v44
    %v46 = vsel %vm41, 0.0625, %v44
    %v47 = vsub.f32 %v24, %v25
    %v48 = vmax.f32 %v24, 0.0
    %v49 = vand.u32 2147483647, %v24
    %v50 = vsub.f32 0.0, %v49
    %v51 = vmul.f32 %v50, 1.442695
    %v52 = vpow.pop %v51
    %v53 = vadd.f32 %v52, 1.0
    %v54 = vlog2.pop %v53
    %v55 = vmul.f32 %v54, 0.6931472
    %v56 = vmul.f32 -0.5, %v52
    %v57 = vadd.f32 %v56, 1.0
    %v58 = vmul.f32 %v57, %v52
    %v59 = vand.u32 2147483647, %v52
    %vm60 = vcmp.lt.f32.partialorder %v59, 0.0004427343
    %v61 = vsel %vm60, %v58, %v55
    %v62 = vadd.f32 %v48, %v61
    %v63 = vmul.f32 %v47, %v47
    %v64 = vmul.f32 %v24, %v25
    %vm65 = vcmask 1041408
    %v66 = vsel %vm65, %v63, 0.0
    %v67 = vrot.slane %v66, 4
    %v68 = vadd.f32 %v66, %v67
    %v69 = vrot.slane %v68, 2
    %v70 = vadd.f32 %v68, %v69
    %v71 = vrot.slane %v70, 1
    %v72 = vadd.f32 %v70, %v71
    %v73 = vsel %vm65, %v62, 0.0
    %v74 = vrot.slane %v73, 4
    %v75 = vadd.f32 %v73, %v74
    %v76 = vrot.slane %v75, 2
    %v77 = vadd.f32 %v75, %v76
    %v78 = vrot.slane %v77, 1
    %v79 = vadd.f32 %v77, %v78
    %v80 = vsel %vm65, %v64, 0.0
    %v81 = vrot.slane %v80, 4
    %v82 = vadd.f32 %v80, %v81
    %v83 = vrot.slane %v82, 2
    %v84 = vadd.f32 %v82, %v83
    %v85 = vrot.slane %v84, 1
    %v86 = vadd.f32 %v84, %v85
    %v87 = vmul.f32 %v43, %v72
    %v88 = vmul.f32 %v45, %v79
    %v89 = vadd.f32 %v87, %v88
    %v90 = vmul.f32 %v46, %v86
    %v91 = vsub.f32 %v89, %v90
    %vm92 = vcmask 1040384
    %v93 = vsel %vm92, %v91, 0.0
    %94 = vadd.xlane.f32.xlu0 %v93
    %v95 = vpop.xlane.xlu0 %94
    %v96 = vrot.slane %v95, 4
    %v97 = vadd.f32 %v95, %v96
    %v98 = vrot.slane %v97, 2
    %v99 = vadd.f32 %v97, %v98
    %v100 = vrot.slane %v99, 1
    %v101 = vadd.f32 %v99, %v100
    %s102 = vtos %v101
    %v103 = vstv %s102
    %104 = vst [vmem:[#allocation5] sm:$0xff] %v103
    // Predicated region
    $region14: #{tpu_custom_call.1} parent=1 // pred_check
      _
    $region15: #{tpu_custom_call.1} parent=1 // pred_check_branch
      %106 = sbr.rel (0) target = $region17
    $region16: #{tpu_custom_call.1} parent=1 // pred_region
      %s108 = ssub.s32 128, 128
      %109 = vsyncadd [#allocation4], %s108
      %s111 = sshll.u32 [#allocation5], 4
      %s112 = int_to_ptr.vmem [resolvable:$true] %s111
      %114 = dma.vmem_to_hbm [thread:$0]  %s112, 128, %s2, [#allocation4]
    $region17: #{tpu_custom_call.1} parent=1 // pred_fallthru
      _
    // Predicated region
    $region18: #{tpu_custom_call.1} parent=1 // pred_check
      _
    $region19: #{tpu_custom_call.1} parent=1 // pred_check_branch
      %116 = sbr.rel (0) target = $region21
    $region20: #{tpu_custom_call.1} parent=1 // pred_region
      %117 = dma.done [#allocation4], 128
    $region21: #{tpu_custom_call.1} parent=1 // pred_fallthru
      _
    %118 = vsyncpa [#allocation3], 1
    %119 = vsyncpa [#allocation4], 1

</llo_original>
